<compile_context>
chip_gen: v7x
topology: tpu7x:2x2x1
jax: 0.10.0
libtpu: 0.0.40
codegen_flags: <defaults>
</compile_context>

<pallas_src>
import jax
import jax.numpy as jnp
from jax.experimental import pallas as pl
from jax.experimental.pallas import tpu as pltpu

block_size = 32   # max sequence length (matches the registered tril buffer)
n_embd = 64
dropout = 0.0     # dropout == 0.0 -> identity; nothing to emulate

_LANE = 128       # padded lane width per projection (q / k / v each get 128 lanes)


def head_kernel(x_ref, wqkv_ref, o_ref):
    # x_ref: (1, T, C) bf16   wqkv_ref: (C, 3*128) bf16 [q|k|v zero-padded slabs]
    # o_ref: (1, T, 128) f32  (real result in lanes [:head_size], rest exactly 0)
    _, T, C = x_ref.shape
    P = o_ref.shape[-1]                       # 128

    x2d = x_ref[0]                            # (T, C) bf16

    # Fused QKV projection, single MXU pass; f32 accumulation.
    qkv = jnp.dot(x2d, wqkv_ref[...], preferred_element_type=jnp.float32)  # (T, 3P)

    # 128-lane-aligned slices (vreg-aligned, no lane relayout); bf16 MXU operands.
    q = qkv[:, 0 * P:1 * P].astype(jnp.bfloat16)   # already scaled by C**-0.5 (folded
    k = qkv[:, 1 * P:2 * P].astype(jnp.bfloat16)   # into the query weight columns)
    v = qkv[:, 2 * P:3 * P].astype(jnp.bfloat16)

    # Scores: contract on the (padded) head dim; padded lanes are zero so they
    # contribute nothing. No explicit transpose of k.
    wei = jnp.einsum('qh,kh->qk', q, k,
                     preferred_element_type=jnp.float32)                   # (T, T)

    # Causal mask. Large finite negative instead of -inf (NaN-safe if generalized).
    row = jax.lax.broadcasted_iota(jnp.int32, (T, T), 0)
    col = jax.lax.broadcasted_iota(jnp.int32, (T, T), 1)
    neg_big = jnp.float32(jnp.finfo(jnp.float32).min)
    wei = jnp.where(col <= row, wei, neg_big)

    # Numerically stable softmax in f32; EUP approximate reciprocal for the denom.
    m = jnp.max(wei, axis=-1, keepdims=True)
    e = jnp.exp(wei - m)
    denom = jnp.sum(e, axis=-1, keepdims=True)
    p = e * pl.reciprocal(denom, approx=True)

    # dropout == 0.0 -> identity. Output is a lane-dense (T, 128) slab (unmasked vst);
    # padded v lanes are zero, so padded output lanes are exactly zero.
    o_ref[0] = jnp.einsum('qk,kh->qh', p.astype(jnp.bfloat16), v,
                          preferred_element_type=jnp.float32)              # (T, P)


def fuse_qkv_weights(w_query, w_key, w_value, n_embd_dim):
    """One-time weight transform: scale q by n_embd**-0.5, zero-pad each projection
    to 128 lanes, concatenate [q | k | v], cast to bf16. Shape: (C, 3*128)."""
    C, H = w_query.shape
    assert H <= _LANE, "head_size > 128 not supported by this kernel"
    scale = jnp.float32(n_embd_dim) ** -0.5

    def pad(w):
        return jnp.pad(w, ((0, 0), (0, _LANE - H)))

    w_qkv = jnp.concatenate([pad(w_query * scale), pad(w_key), pad(w_value)], axis=1)
    return w_qkv.astype(jnp.bfloat16)


def head_forward(x, w_qkv_padded, head_size):
    """x: (B, T, C) f32; w_qkv_padded: (C, 3*128) bf16 fused [q|k|v] weights.

    Returns (B, T, head_size) f32.
    """
    B, T, C = x.shape
    P = w_qkv_padded.shape[1] // 3            # 128

    out_padded = pl.pallas_call(
        head_kernel,
        out_shape=jax.ShapeDtypeStruct((B, T, P), jnp.float32),
        grid=(B,),
        in_specs=[
            pl.BlockSpec((1, T, C), lambda b: (b, 0, 0)),
            pl.BlockSpec((C, 3 * P), lambda b: (0, 0)),   # weights stay resident
        ],
        out_specs=pl.BlockSpec((1, T, P), lambda b: (b, 0, 0)),
        compiler_params=pltpu.CompilerParams(
            dimension_semantics=("parallel",)),            # v7x: shard batch over TCs
    )(x.astype(jnp.bfloat16), w_qkv_padded)

    return out_padded[:, :, :head_size]


def reference_forward(x, w_key, w_query, w_value):
    B, T, C = x.shape
    k = x @ w_key
    q = x @ w_query
    v = x @ w_value
    wei = (q @ jnp.swapaxes(k, -2, -1)) * (C ** -0.5)
    mask = jnp.tril(jnp.ones((T, T), dtype=bool))
    wei = jnp.where(mask, wei, -jnp.inf)
    wei = jax.nn.softmax(wei, axis=-1)
    return wei @ v


if __name__ == "__main__":
    head_size = 16
    B, T, C = 2, block_size, n_embd

    key = jax.random.PRNGKey(0)
    kx, kk, kq, kv = jax.random.split(key, 4)

    x = jax.random.normal(kx, (B, T, C), dtype=jnp.float32)
    # Deterministic "Linear(bias=False)" weights, stored as (in, out) = (C, H)
    bound = 1.0 / (C ** 0.5)
    w_key = jax.random.uniform(kk, (C, head_size), jnp.float32, -bound, bound)
    w_query = jax.random.uniform(kq, (C, head_size), jnp.float32, -bound, bound)
    w_value = jax.random.uniform(kv, (C, head_size), jnp.float32, -bound, bound)

    w_qkv = fuse_qkv_weights(w_query, w_key, w_value, C)

    out = jax.block_until_ready(head_forward(x, w_qkv, head_size))
    ref = reference_forward(x, w_key, w_query, w_value)

    assert out.shape == (B, T, head_size)
    # Tolerance accounts for bf16 MXU operands + approximate EUP reciprocal.
    assert jnp.allclose(out, ref, atol=2e-2, rtol=2e-2)

    print("KERNEL_OK")
</pallas_src>

<mosaic_0001>
module attributes {stable_mosaic.version = 11 : i64} {
  func.func @head_kernel(%arg0: i32, %arg1: memref<1x32x64xbf16, #tpu.memory_space<vmem>>, %arg2: memref<64x384xbf16, #tpu.memory_space<vmem>>, %arg3: memref<1x32x128xf32, #tpu.memory_space<vmem>>) attributes {dimension_semantics = [#tpu.dimension_semantics<parallel>], iteration_bounds = array<i64: 2>, scalar_prefetch = 0 : i64, scratch_operands = 0 : i64, tpu.core_type = #tpu.core_type<tc>, window_params = [{transform_indices = @transform_0, window_bounds = array<i64: 1, 32, 64>}, {pipeline_mode = #tpu.pipeline_mode<synchronous>, transform_indices = @transform_1, window_bounds = array<i64: 64, 384>}, {transform_indices = @transform_2, window_bounds = array<i64: 1, 32, 128>}]} {
    %c0 = arith.constant 0 : index
    %c0_0 = arith.constant 0 : index
    %c0_1 = arith.constant 0 : index
    %0 = vector.load %arg1[%c0, %c0_0, %c0_1] : memref<1x32x64xbf16, #tpu.memory_space<vmem>>, vector<1x32x64xbf16>
    %1 = vector.shape_cast %0 : vector<1x32x64xbf16> to vector<32x64xbf16>
    %c0_2 = arith.constant 0 : index
    %c0_3 = arith.constant 0 : index
    %2 = vector.load %arg2[%c0_2, %c0_3] : memref<64x384xbf16, #tpu.memory_space<vmem>>, vector<64x384xbf16>
    %cst = arith.constant dense<0.000000e+00> : vector<32x384xf32>
    %3 = tpu.matmul %1, %2, %cst {dimension_numbers = #tpu.dot_dimension_numbers<[1], [0], [0], [1], [0, 0, 1, 1], [], []>} : vector<32x64xbf16>, vector<64x384xbf16>, vector<32x384xf32> -> vector<32x384xf32>
    %4 = vector.extract_strided_slice %3 {offsets = [0, 0], sizes = [32, 128], strides = [1, 1]} : vector<32x384xf32> to vector<32x128xf32>
    %5 = arith.truncf %4 : vector<32x128xf32> to vector<32x128xbf16>
    %6 = vector.extract_strided_slice %3 {offsets = [0, 128], sizes = [32, 128], strides = [1, 1]} : vector<32x384xf32> to vector<32x128xf32>
    %7 = arith.truncf %6 : vector<32x128xf32> to vector<32x128xbf16>
    %8 = vector.extract_strided_slice %3 {offsets = [0, 256], sizes = [32, 128], strides = [1, 1]} : vector<32x384xf32> to vector<32x128xf32>
    %9 = arith.truncf %8 : vector<32x128xf32> to vector<32x128xbf16>
    "tpu.trace_start"() <{level = 10 : i32, message = "qh,kh->qk"}> : () -> ()
    %cst_4 = arith.constant dense<0.000000e+00> : vector<32x32xf32>
    %10 = tpu.matmul %5, %7, %cst_4 {dimension_numbers = #tpu.dot_dimension_numbers<[1], [1], [0], [0], [0, 0, 1, 0], [], []>} : vector<32x128xbf16>, vector<32x128xbf16>, vector<32x32xf32> -> vector<32x32xf32>
    "tpu.trace_stop"() : () -> ()
    %11 = tpu.iota {dimensions = array<i32: 0>} : vector<32x32xi32>
    %12 = tpu.iota {dimensions = array<i32: 1>} : vector<32x32xi32>
    %13 = arith.cmpi sle, %12, %11 : vector<32x32xi32>
    %cst_5 = arith.constant -3.40282347E+38 : f32
    %14 = vector.broadcast %cst_5 : f32 to vector<32x32xf32>
    %15 = arith.select %13, %10, %14 : vector<32x32xi1>, vector<32x32xf32>
    %cst_6 = arith.constant dense<0xFF800000> : vector<32xf32>
    %16 = vector.multi_reduction <maximumf>, %15, %cst_6 [1] : vector<32x32xf32> to vector<32xf32>
    %17 = vector.shape_cast %16 : vector<32xf32> to vector<32x1xf32>
    %18 = vector.broadcast %17 : vector<32x1xf32> to vector<32x32xf32>
    %19 = arith.subf %15, %18 : vector<32x32xf32>
    %20 = math.exp %19 : vector<32x32xf32>
    %cst_7 = arith.constant dense<0.000000e+00> : vector<32xf32>
    %21 = vector.multi_reduction <add>, %20, %cst_7 [1] : vector<32x32xf32> to vector<32xf32>
    %22 = vector.shape_cast %21 : vector<32xf32> to vector<32x1xf32>
    %23 = tpu.reciprocal %22 {approx = true} : vector<32x1xf32> -> vector<32x1xf32>
    %24 = vector.broadcast %23 : vector<32x1xf32> to vector<32x32xf32>
    %25 = arith.mulf %20, %24 : vector<32x32xf32>
    %26 = arith.truncf %25 : vector<32x32xf32> to vector<32x32xbf16>
    "tpu.trace_start"() <{level = 10 : i32, message = "qk,kh->qh"}> : () -> ()
    %cst_8 = arith.constant dense<0.000000e+00> : vector<32x128xf32>
    %27 = tpu.matmul %26, %9, %cst_8 {dimension_numbers = #tpu.dot_dimension_numbers<[1], [0], [0], [1], [0, 0, 1, 1], [], []>} : vector<32x32xbf16>, vector<32x128xbf16>, vector<32x128xf32> -> vector<32x128xf32>
    "tpu.trace_stop"() : () -> ()
    %c0_9 = arith.constant 0 : index
    %c0_10 = arith.constant 0 : index
    %c0_11 = arith.constant 0 : index
    %28 = vector.load %arg3[%c0_9, %c0_10, %c0_11] : memref<1x32x128xf32, #tpu.memory_space<vmem>>, vector<1x32x128xf32>
    %29 = vector.shape_cast %28 : vector<1x32x128xf32> to vector<32x128xf32>
    %30 = vector.shape_cast %27 : vector<32x128xf32> to vector<1x32x128xf32>
    tpu.vector_store %arg3[%c0_9, %c0_10, %c0_11], %30 {strides = array<i32>} : memref<1x32x128xf32, #tpu.memory_space<vmem>>, vector<1x32x128xf32>,
    return
  }
  func.func @transform_0(%arg0: i32) -> (i32, i32, i32) {
    %c0_i32 = arith.constant 0 : i32
    %c0_i32_0 = arith.constant 0 : i32
    %c0_i32_1 = arith.constant 0 : i32
    return %arg0, %c0_i32, %c0_i32_0 : i32, i32, i32
  }
  func.func @transform_1(%arg0: i32) -> (i32, i32) {
    %c0_i32 = arith.constant 0 : i32
    %c0_i32_0 = arith.constant 0 : i32
    %c0_i32_1 = arith.constant 0 : i32
    return %c0_i32, %c0_i32_0 : i32, i32
  }
  func.func @transform_2(%arg0: i32) -> (i32, i32, i32) {
    %c0_i32 = arith.constant 0 : i32
    %c0_i32_0 = arith.constant 0 : i32
    %c0_i32_1 = arith.constant 0 : i32
    return %arg0, %c0_i32, %c0_i32_0 : i32, i32, i32
  }
}

</mosaic_0001>

<llo_original>
// kernel: tpu_custom_call.1
$region0: #{tpu_custom_call.1}
  #allocation0 [shape = 'u32[]', space=smem, size = 0x4, offset = 0x4, fixed_abs, tag = 'smem constant byte address 0x4 - core index']
  #allocation1 [shape = 'u32[144,128]{1,0:T(1,128)}', space=vmem, size = 0x12000, scoped, tag = 'internal scratch']
  %s0 = inlined_call_operand.hbm [shape: bf16[2,32,64], index: 0, kind: input, shape index: {}]
  %s1 = inlined_call_operand.hbm [shape: bf16[64,384], index: 1, kind: input, shape index: {}]
  %s2 = inlined_call_operand.hbm [shape: f32[2,32,128], index: 2, kind: output, shape index: {}]
  %s3 = sld [smem:[#allocation0]]
  $region49: #{tpu_custom_call.1} parent=0
    _
  %s5 = ssub.s32 1, %s3
  %s6 = scalar_select 0, %s5, %s3
  $region1: #{tpu_custom_call.1} parent=0
    #allocation2 [shape = 'u8[16384]{0}', space=vmem, size = 0x4000, scoped, tag = 'input window, operand 0']
    #allocation3 [shape = 's32[2]{0}', space=sflag, size = 0x8, scoped, tag = 'scoped memory for tpu_custom_call.1']
    #allocation4 [shape = 's32[2]{0}', space=sflag, size = 0x8, scoped, tag = 'scoped memory for tpu_custom_call.1']
    #allocation5 [shape = 'u8[49152]{0}', space=vmem, size = 0xc000, scoped, tag = 'input window, operand 1, single buffered']
    #allocation6 [shape = 's32[1]{0}', space=sflag, size = 0x4, scoped, tag = 'scoped memory for tpu_custom_call.1']
    #allocation7 [shape = 'u8[32768]{0}', space=vmem, size = 0x8000, scoped, tag = 'output window, operand 0']
    %7 = vsyncpa [#allocation3], 0
    %s8 = scalar_lea.sflag [#allocation3], 1
    %9 = vsyncpa %s8, 0
    %10 = vsyncpa [#allocation6], 0
    %11 = vsyncpa [#allocation4], 0
    %s12 = scalar_lea.sflag [#allocation4], 1
    %13 = vsyncpa %s12, 0
    loop: start=0, step=1, limit=4
    $region2: #{tpu_custom_call.1} parent=1 // loop_pre_header
      _
    $region3: #{tpu_custom_call.1} parent=1 // loop_header
      %s15 = sphi 0, %s19
      %p16 = scmp.ge.s32.totalorder %s15, 4
      %s25 = sphi 0, %s27
      %s28 = sphi 0, %s25
      %s29 = sphi 0, %s28
      %s45 = sphi 0, %s29
      %s49 = sphi 0, %s49
      %s51 = sphi 0, %s49
      %s52 = sphi 0, %s51
      %s66 = sphi 0, %s52
      %s72 = sphi 0, %s74
      %s75 = sphi 0, %s72
      %s76 = sphi 0, %s75
      %s92 = sphi 0, %s76
    $region4: #{tpu_custom_call.1} parent=1 // loop_header_branch
      %18 = sbr.rel (%p16) target = $region8
    $region5: #{tpu_custom_call.1} parent=1 // loop_body
      %s20 = ssub.s32 %s15, 1
      %s21 = ssub.s32 %s15, 2
      %s22 = sadd.s32 %s15, 1
      %s23 = ssub.s32 %s15, %s22
      %p24 = scmp.eq.s32.totalorder %s23, 0
      %s26 = sadd.s32 %s25, 1
      %s27 = scalar_select %p24, %s25, %s26
      %p30 = pneg %p24
      %p31 = scmp.eq.s32.totalorder %s15, 1
      %p32 = por %p30, %p31
      %p33 = scmp.ne.s32.totalorder %s25, %s28
      %p34 = scmp.eq.s32.totalorder %s15, 0
      %p35 = por %p33, %p34
      %p36 = scmp.ne.s32.totalorder %s25, %s28
      %p37 = scmp.eq.s32.totalorder %s20, 1
      %p38 = por %p36, %p37
      %p39 = scmp.ne.s32.totalorder %s28, %s29
      %p40 = scmp.eq.s32.totalorder %s20, 0
      %p41 = por %p39, %p40
      %p42 = scmp.ne.s32.totalorder %s28, %s29
      %p43 = scmp.eq.s32.totalorder %s21, 1
      %p44 = por %p42, %p43
      %p46 = scmp.ne.s32.totalorder %s29, %s45
      %p47 = scmp.eq.s32.totalorder %s21, 0
      %p48 = por %p46, %p47
      %s50 = sadd.s32 %s49, 1
      %p53 = scmp.eq.s32.totalorder %s15, 1
      %p54 = scmp.ne.s32.totalorder %s49, %s51
      %p55 = scmp.eq.s32.totalorder %s15, 0
      %p56 = por %p54, %p55
      %p57 = scmp.ne.s32.totalorder %s49, %s51
      %p58 = scmp.eq.s32.totalorder %s20, 1
      %p59 = por %p57, %p58
      %p60 = scmp.ne.s32.totalorder %s51, %s52
      %p61 = scmp.eq.s32.totalorder %s20, 0
      %p62 = por %p60, %p61
      %p63 = scmp.ne.s32.totalorder %s51, %s52
      %p64 = scmp.eq.s32.totalorder %s21, 1
      %p65 = por %p63, %p64
      %p67 = scmp.ne.s32.totalorder %s52, %s66
      %p68 = scmp.eq.s32.totalorder %s21, 0
      %p69 = por %p67, %p68
      %s70 = ssub.s32 %s15, %s22
      %p71 = scmp.eq.s32.totalorder %s70, 0
      %s73 = sadd.s32 %s72, 1
      %s74 = scalar_select %p71, %s72, %s73
      %p77 = pneg %p71
      %p78 = scmp.eq.s32.totalorder %s15, 1
      %p79 = por %p77, %p78
      %p80 = scmp.ne.s32.totalorder %s72, %s75
      %p81 = scmp.eq.s32.totalorder %s15, 0
      %p82 = por %p80, %p81
      %p83 = scmp.ne.s32.totalorder %s72, %s75
      %p84 = scmp.eq.s32.totalorder %s20, 1
      %p85 = por %p83, %p84
      %p86 = scmp.ne.s32.totalorder %s75, %s76
      %p87 = scmp.eq.s32.totalorder %s20, 0
      %p88 = por %p86, %p87
      %p89 = scmp.ne.s32.totalorder %s75, %s76
      %p90 = scmp.eq.s32.totalorder %s21, 1
      %p91 = por %p89, %p90
      %p93 = scmp.ne.s32.totalorder %s76, %s92
      %p94 = scmp.eq.s32.totalorder %s21, 0
      %p95 = por %p93, %p94
      %p96 = scmp.le.s32.totalorder 1, %s15
      %p97 = scmp.lt.s32.totalorder %s15, 3
      %p98 = pnand %p96, %p97
      %p99 = pneg %p98
      // Predicated region
      $region9: #{tpu_custom_call.1} parent=5 // pred_check
        _
      $region10: #{tpu_custom_call.1} parent=5 // pred_check_branch
        %101 = sbr.rel (%p98) target = $region12
      $region11: #{tpu_custom_call.1} parent=5 // pred_region
        %s102 = ssub.s32 %s15, 1
        // Predicated region
        $region13: #{tpu_custom_call.1} parent=11 // pred_check
          %p103 = pneg %p62
        $region14: #{tpu_custom_call.1} parent=11 // pred_check_branch
          %105 = sbr.rel (%p103) target = $region16
        $region15: #{tpu_custom_call.1} parent=11 // pred_region
          %s107 = ssub.s32 1536, 1536
          %108 = vsyncadd [#allocation6], %s107
          %s109 = sshll.u32 [#allocation5], 4
          %s110 = int_to_ptr.vmem [resolvable:$true] %s109
          %115 = dma.hbm_to_vmem [thread:$0]  %s1, 1536, %s110, [#allocation6], 192, 192, 12
        $region16: #{tpu_custom_call.1} parent=11 // pred_fallthru
          _
      $region12: #{tpu_custom_call.1} parent=5 // pred_fallthru
        _
      %p116 = scmp.lt.s32.totalorder %s15, 2
      // Predicated region
      $region17: #{tpu_custom_call.1} parent=5 // pred_check
        %p117 = pneg %p116
      $region18: #{tpu_custom_call.1} parent=5 // pred_check_branch
        %119 = sbr.rel (%p117) target = $region20
      $region19: #{tpu_custom_call.1} parent=5 // pred_region
        // Predicated region
        $region21: #{tpu_custom_call.1} parent=19 // pred_check
          %p120 = pneg %p35
        $region22: #{tpu_custom_call.1} parent=19 // pred_check_branch
          %122 = sbr.rel (%p120) target = $region24
        $region23: #{tpu_custom_call.1} parent=19 // pred_region
          %s123 = sand.u32 %s25, 1
          %s124 = scalar_lea.sflag [#allocation3], %s123
          %s125 = sand.u32 %s25, 1
          %s126 = smul.addr %s125, 16
          %s127 = scalar_lea.vmem [#allocation2], %s126
          %s129 = ssub.s32 256, 256
          %130 = vsyncadd %s124, %s129
          %s131 = smul.addr %s15, 4
          %s132 = smul.addr %s131, 64
          %s133 = scalar_lea.hbm %s0, %s132
          %s134 = sshll.u32 %s127, 4
          %s135 = int_to_ptr.vmem [resolvable:$true] %s134
          %140 = dma.hbm_to_vmem [thread:$0]  %s133, 256, %s135, %s124, 64, 64, 4
        $region24: #{tpu_custom_call.1} parent=19 // pred_fallthru
          _
      $region20: #{tpu_custom_call.1} parent=5 // pred_fallthru
        _
      %p141 = scmp.le.s32.totalorder 1, %s15
      %p142 = scmp.lt.s32.totalorder %s15, 3
      %p143 = pnand %p141, %p142
      %p144 = pneg %p143
      // Predicated region
      $region25: #{tpu_custom_call.1} parent=5 // pred_check
        _
      $region26: #{tpu_custom_call.1} parent=5 // pred_check_branch
        %146 = sbr.rel (%p143) target = $region28
      $region27: #{tpu_custom_call.1} parent=5 // pred_region
        %s147 = ssub.s32 %s15, 1
        %s148 = sand.u32 %s28, 1
        %s149 = scalar_lea.sflag [#allocation3], %s148
        %s150 = sand.u32 %s28, 1
        %s151 = smul.addr %s150, 16
        %s152 = scalar_lea.vmem [#allocation2], %s151
        // Predicated region
        $region29: #{tpu_custom_call.1} parent=27 // pred_check
          %p153 = pneg %p41
        $region30: #{tpu_custom_call.1} parent=27 // pred_check_branch
          %155 = sbr.rel (%p153) target = $region32
        $region31: #{tpu_custom_call.1} parent=27 // pred_region
          %156 = dma.done %s149, 256
        $region32: #{tpu_custom_call.1} parent=27 // pred_fallthru
          _
        // Predicated region
        $region33: #{tpu_custom_call.1} parent=27 // pred_check
          %p157 = pneg %p62
        $region34: #{tpu_custom_call.1} parent=27 // pred_check_branch
          %159 = sbr.rel (%p157) target = $region36
        $region35: #{tpu_custom_call.1} parent=27 // pred_region
          %160 = dma.done [#allocation6], 1536
        $region36: #{tpu_custom_call.1} parent=27 // pred_fallthru
          _
        %s161 = sand.u32 %s28, 1
        %s162 = scalar_lea.sflag [#allocation3], %s161
        %s163 = sand.u32 %s28, 1
        %s164 = smul.addr %s163, 16
        %s165 = scalar_lea.vmem [#allocation2], %s164
        %p166 = pneg %p41
        %p167 = pneg %p38
        %p168 = pneg %p62
        %p169 = pneg %p59
        %p170 = pneg %p88
        %p171 = pneg %p85
        %s172 = sand.u32 %s75, 1
        %s173 = scalar_lea.sflag [#allocation4], %s172
        %s174 = sand.u32 %s75, 1
        %s175 = smul.addr %s174, 32
        %s176 = scalar_lea.vmem [#allocation7], %s175
        %v178 = vld [vmem:[%s152] sm:$0xf]
        %v179 = vld [vmem:[%s152 + $0x4] sm:$0xf]
        %v180 = vld [vmem:[%s152 + $0x8] sm:$0xf]
        %v181 = vld [vmem:[%s152 + $0xc] sm:$0xf]
        %v182 = vld [vmem:[#allocation5] sm:$0xff]
        %v183 = vld [vmem:[#allocation5 + $0x8] sm:$0xf]
        %v184 = vld [vmem:[#allocation5 + $0xc] sm:$0xff]
        %v185 = vld [vmem:[#allocation5 + $0x14] sm:$0xf]
        %v186 = vld [vmem:[#allocation5 + $0x18] sm:$0xff]
        %v187 = vld [vmem:[#allocation5 + $0x20] sm:$0xf]
        %v188 = vld [vmem:[#allocation5 + $0x24] sm:$0xff]
        %v189 = vld [vmem:[#allocation5 + $0x2c] sm:$0xf]
        %v190 = vld [vmem:[#allocation5 + $0x30] sm:$0xff]
        %v191 = vld [vmem:[#allocation5 + $0x38] sm:$0xf]
        %v192 = vld [vmem:[#allocation5 + $0x3c] sm:$0xff]
        %v193 = vld [vmem:[#allocation5 + $0x44] sm:$0xf]
        %v194 = vld [vmem:[#allocation5 + $0x48] sm:$0xff]
        %v195 = vld [vmem:[#allocation5 + $0x50] sm:$0xf]
        %v196 = vld [vmem:[#allocation5 + $0x54] sm:$0xff]
        %v197 = vld [vmem:[#allocation5 + $0x5c] sm:$0xf]
        %v202 = vunpack.c.l.b16 %v178
        %v203 = vunpack.c.l.b16 %v179
        %v204 = vunpack.c.l.b16 %v180
        %v205 = vunpack.c.l.b16 %v181
        %v206 = vpack.c.b16 %v203, %v202
        %v207 = vpack.c.b16 %v205, %v204
        %v224 = vunpack.c.l.b16 %v182
        %v225 = vunpack.c.h.b16 %v182
        %v226 = vunpack.c.l.b16 %v183
        %v227 = vunpack.c.l.b16 %v184
        %v228 = vunpack.c.h.b16 %v184
        %v229 = vunpack.c.l.b16 %v185
        %v230 = vunpack.c.l.b16 %v186
        %v231 = vunpack.c.h.b16 %v186
        %v232 = vunpack.c.l.b16 %v187
        %v233 = vunpack.c.l.b16 %v188
        %v234 = vunpack.c.h.b16 %v188
        %v235 = vunpack.c.l.b16 %v189
        %v236 = vunpack.c.l.b16 %v190
        %v237 = vunpack.c.h.b16 %v190
        %v238 = vunpack.c.l.b16 %v191
        %v239 = vunpack.c.l.b16 %v192
        %v240 = vunpack.c.h.b16 %v192
        %v241 = vunpack.c.l.b16 %v193
        %v242 = vunpack.c.l.b16 %v194
        %v243 = vunpack.c.h.b16 %v194
        %v244 = vunpack.c.l.b16 %v195
        %v245 = vunpack.c.l.b16 %v196
        %v246 = vunpack.c.h.b16 %v196
        %v247 = vunpack.c.l.b16 %v197
        %v248 = vpack.c.b16 %v227, %v224
        %v249 = vpack.c.b16 %v228, %v225
        %v250 = vpack.c.b16 %v229, %v226
        %v251 = vpack.c.b16 %v233, %v230
        %v252 = vpack.c.b16 %v234, %v231
        %v253 = vpack.c.b16 %v235, %v232
        %v254 = vpack.c.b16 %v239, %v236
        %v255 = vpack.c.b16 %v240, %v237
        %v256 = vpack.c.b16 %v241, %v238
        %v257 = vpack.c.b16 %v245, %v242
        %v258 = vpack.c.b16 %v246, %v243
        %v259 = vpack.c.b16 %v247, %v244
        %vm272 = vcmask 523264
        %v274 = vsel %vm272, %v206, 0
        %v277 = vsel %vm272, %v207, 0
        %279 = vmatprep.subr.bf16.mxu0 %v249
        %280 = vmatpush1.bf16.msra.mxu0 %v248
        %281 = vmatprep.subr.bf16.mxu0 %v252
        %282 = vmatpush1.bf16.msra.mxu0 %v251
        %283 = vmatprep.subr.bf16.mxu0 %v255
        %284 = vmatpush1.bf16.msra.mxu0 %v254
        %285 = vmatprep.subr.bf16.mxu0 %v258
        %286 = vmatpush1.bf16.msra.mxu0 %v257
        %287 = vmatprep.subr.bf16.mxu0 0
        %288 = vmatpush1.bf16.msra.mxu0 0
        %289 = vmatprep.subr.bf16.mxu0 0
        %290 = vmatpush1.bf16.msra.mxu0 0
        %291 = vmatprep.subr.bf16.mxu0 0
        %292 = vmatpush1.bf16.msra.mxu0 0
        %293 = vmatprep.subr.bf16.mxu0 0
        %294 = vmatpush1.bf16.msra.mxu0 0
        %295 = vmatprep.subr.bf16.mxu0 0
        %296 = vmatpush1.bf16.msra.mxu0 0
        %297 = vmatprep.subr.bf16.mxu0 0
        %298 = vmatpush1.bf16.msra.mxu0 0
        %299 = vmatprep.subr.bf16.mxu0 0
        %300 = vmatpush1.bf16.msra.mxu0 0
        %301 = vmatprep.subr.bf16.mxu0 0
        %302 = vmatpush1.bf16.msra.mxu0 0
        %303 = vmatprep.subr.bf16.mxu0 0
        %304 = vmatpush1.bf16.msra.mxu0 0
        %305 = vmatprep.subr.bf16.mxu0 0
        %306 = vmatpush1.bf16.msra.mxu0 0
        %307 = vmatprep.subr.bf16.mxu0 0
        %308 = vmatpush1.bf16.msra.mxu0 0
        %309 = vmatprep.subr.bf16.mxu0 0
        %310 = vmatpush1.bf16.msra.mxu0 0
        %311 = vmatprep.mubr.bf16.mxu0 0
        %312 = vmatmul.mubr.bf16.gmra.mrb[0].mxu0 %v274
        %v313 = vpop.f32.mrb[0].mxu0
        %v314 = vadd.f32 0.0, %v313
        %v315 = vpop.f32.mrb[0].mxu0
        %v316 = vadd.f32 0.0, %v315
        %v317 = vpop.f32.mrb[0].mxu0
        %v318 = vadd.f32 0.0, %v317
        %v319 = vpop.f32.mrb[0].mxu0
        %v320 = vadd.f32 0.0, %v319
        %321 = vmatprep.mubr.bf16.mxu0 0
        %322 = vmatmul.mubr.bf16.gmra.mrb[0].mxu0 %v277
        %v323 = vpop.f32.mrb[0].mxu0
        %v324 = vadd.f32 0.0, %v323
        %v325 = vpop.f32.mrb[0].mxu0
        %v326 = vadd.f32 0.0, %v325
        %v327 = vpop.f32.mrb[0].mxu0
        %v328 = vadd.f32 0.0, %v327
        %v329 = vpop.f32.mrb[0].mxu0
        %v330 = vadd.f32 0.0, %v329
        %331 = vdwg.mxu0
        %332 = vmatprep.subr.bf16.mxu0 0
        %333 = vmatpush1.bf16.msra.mxu0 %v250
        %334 = vmatprep.subr.bf16.mxu0 0
        %335 = vmatpush1.bf16.msra.mxu0 %v253
        %336 = vmatprep.subr.bf16.mxu0 0
        %337 = vmatpush1.bf16.msra.mxu0 %v256
        %338 = vmatprep.subr.bf16.mxu0 0
        %339 = vmatpush1.bf16.msra.mxu0 %v259
        %340 = vmatprep.subr.bf16.mxu0 0
        %341 = vmatpush1.bf16.msra.mxu0 0
        %342 = vmatprep.subr.bf16.mxu0 0
        %343 = vmatpush1.bf16.msra.mxu0 0
        %344 = vmatprep.subr.bf16.mxu0 0
        %345 = vmatpush1.bf16.msra.mxu0 0
        %346 = vmatprep.subr.bf16.mxu0 0
        %347 = vmatpush1.bf16.msra.mxu0 0
        %348 = vmatprep.subr.bf16.mxu0 0
        %349 = vmatpush1.bf16.msra.mxu0 0
        %350 = vmatprep.subr.bf16.mxu0 0
        %351 = vmatpush1.bf16.msra.mxu0 0
        %352 = vmatprep.subr.bf16.mxu0 0
        %353 = vmatpush1.bf16.msra.mxu0 0
        %354 = vmatprep.subr.bf16.mxu0 0
        %355 = vmatpush1.bf16.msra.mxu0 0
        %356 = vmatprep.subr.bf16.mxu0 0
        %357 = vmatpush1.bf16.msra.mxu0 0
        %358 = vmatprep.subr.bf16.mxu0 0
        %359 = vmatpush1.bf16.msra.mxu0 0
        %360 = vmatprep.subr.bf16.mxu0 0
        %361 = vmatpush1.bf16.msra.mxu0 0
        %362 = vmatprep.subr.bf16.mxu0 0
        %363 = vmatpush1.bf16.msra.mxu0 0
        %364 = vmatprep.mubr.bf16.mxu0 0
        %365 = vmatmul.mubr.bf16.gmra.mrb[0].mxu0 %v274
        %v366 = vpop.f32.mrb[0].mxu0
        %v367 = vadd.f32 0.0, %v366
        %v368 = vpop.f32.mrb[0].mxu0
        %v369 = vpop.f32.mrb[0].mxu0
        %v370 = vadd.f32 0.0, %v369
        %v371 = vpop.f32.mrb[0].mxu0
        %372 = vmatprep.mubr.bf16.mxu0 0
        %373 = vmatmul.mubr.bf16.gmra.mrb[0].mxu0 %v277
        %v374 = vpop.f32.mrb[0].mxu0
        %v375 = vadd.f32 0.0, %v374
        %v376 = vpop.f32.mrb[0].mxu0
        %v377 = vpop.f32.mrb[0].mxu0
        %v378 = vadd.f32 0.0, %v377
        %v379 = vpop.f32.mrb[0].mxu0
        %380 = vdwg.mxu0
        %v381 = vpack.c.bf16 %v318, %v314
        %v382 = vpack.c.bf16 %v328, %v324
        %v383 = vpack.c.bf16 %v320, %v316
        %v384 = vpack.c.bf16 %v330, %v326
        %v385 = vpack.c.bf16 %v370, %v367
        %v386 = vpack.c.bf16 %v378, %v375
        %387 = vmatprep.subr.bf16.mxu0 0
        %388 = vmatpush1.bf16.xpose.msra.mxu0 %v383
        %389 = vmatprep.subr.bf16.mxu0 0
        %390 = vmatpush1.bf16.xpose.msra.mxu0 %v384
        %391 = vmatprep.subr.bf16.mxu0 0
        %392 = vmatpush1.bf16.xpose.msra.mxu0 0
        %393 = vmatprep.subr.bf16.mxu0 0
        %394 = vmatpush1.bf16.xpose.msra.mxu0 0
        %395 = vmatprep.subr.bf16.mxu0 0
        %396 = vmatpush1.bf16.xpose.msra.mxu0 0
        %397 = vmatprep.subr.bf16.mxu0 0
        %398 = vmatpush1.bf16.xpose.msra.mxu0 0
        %399 = vmatprep.subr.bf16.mxu0 0
        %400 = vmatpush1.bf16.xpose.msra.mxu0 0
        %401 = vmatprep.subr.bf16.mxu0 0
        %402 = vmatpush1.bf16.xpose.msra.mxu0 0
        %403 = vmatprep.subr.bf16.mxu0 0
        %404 = vmatpush1.bf16.xpose.msra.mxu0 0
        %405 = vmatprep.subr.bf16.mxu0 0
        %406 = vmatpush1.bf16.xpose.msra.mxu0 0
        %407 = vmatprep.subr.bf16.mxu0 0
        %408 = vmatpush1.bf16.xpose.msra.mxu0 0
        %409 = vmatprep.subr.bf16.mxu0 0
        %410 = vmatpush1.bf16.xpose.msra.mxu0 0
        %411 = vmatprep.subr.bf16.mxu0 0
        %412 = vmatpush1.bf16.xpose.msra.mxu0 0
        %413 = vmatprep.subr.bf16.mxu0 0
        %414 = vmatpush1.bf16.xpose.msra.mxu0 0
        %415 = vmatprep.subr.bf16.mxu0 0
        %416 = vmatpush1.bf16.xpose.msra.mxu0 0
        %417 = vmatprep.subr.bf16.mxu0 0
        %418 = vmatpush1.bf16.xpose.msra.mxu0 0
        %419 = vmatprep.mubr.bf16.mxu0 0
        %420 = vmatmul.mubr.bf16.gmra.mrb[0].mxu0 %v381
        %v421 = vpop.f32.mrb[0].mxu0
        %v422 = vadd.f32 0.0, %v421
        %v423 = vpop.f32.mrb[0].mxu0
        %v424 = vpop.f32.mrb[0].mxu0
        %v425 = vadd.f32 0.0, %v424
        %v426 = vpop.f32.mrb[0].mxu0
        %427 = vmatprep.mubr.bf16.mxu0 0
        %428 = vmatmul.mubr.bf16.gmra.mrb[0].mxu0 %v382
        %v429 = vpop.f32.mrb[0].mxu0
        %v430 = vadd.f32 0.0, %v429
        %v431 = vpop.f32.mrb[0].mxu0
        %v432 = vpop.f32.mrb[0].mxu0
        %v433 = vadd.f32 0.0, %v432
        %v434 = vpop.f32.mrb[0].mxu0
        %435 = vdwg.mxu0
        %v436 = vlaneseq
        %v437 = vshrl.u32 %v436, 7
        %v438 = vadd.s32 %v437, 8
        %v439 = vadd.s32 %v437, 16
        %v440 = vadd.s32 %v437, 24
        %v441 = vlaneseq
        %v442 = vand.u32 %v441, 127
        %vm443 = vcmp.le.s32.totalorder %v442, %v437
        %vm444 = vcmp.le.s32.totalorder %v442, %v438
        %vm445 = vcmp.le.s32.totalorder %v442, %v439
        %vm446 = vcmp.le.s32.totalorder %v442, %v440
        %v447 = vsel %vm443, %v422, -3.4028235e+38
        %v448 = vsel %vm444, %v425, -3.4028235e+38
        %v449 = vsel %vm445, %v430, -3.4028235e+38
        %v450 = vsel %vm446, %v433, -3.4028235e+38
        %vm451 = vcmask 261120
        %v452 = vsel %vm451, %v447, -inf
        %453 = vmax.xlane.f32.xlu0 %v452
        %v454 = vpop.xlane.xlu0 %453
        %v455 = vsel %vm451, %v448, -inf
        %456 = vmax.xlane.f32.xlu0 %v455
        %v457 = vpop.xlane.xlu0 %456
        %v458 = vsel %vm451, %v449, -inf
        %459 = vmax.xlane.f32.xlu0 %v458
        %v460 = vpop.xlane.xlu0 %459
        %v461 = vsel %vm451, %v450, -inf
        %462 = vmax.xlane.f32.xlu0 %v461
        %v463 = vpop.xlane.xlu0 %462
        %v464 = vsub.f32 %v447, %v454
        %v465 = vsub.f32 %v448, %v457
        %v466 = vsub.f32 %v449, %v460
        %v467 = vsub.f32 %v450, %v463
        %v468 = vmul.f32 %v464, 1.442695
        %v469 = vpow.pop %v468
        %v470 = vmul.f32 %v465, 1.442695
        %v471 = vpow.pop %v470
        %v472 = vmul.f32 %v466, 1.442695
        %v473 = vpow.pop %v472
        %v474 = vmul.f32 %v467, 1.442695
        %v475 = vpow.pop %v474
        %v476 = vsel %vm451, %v469, 0.0
        %477 = vadd.xlane.f32.xlu0 %v476
        %v478 = vpop.xlane.xlu0 %477
        %v479 = vsel %vm451, %v471, 0.0
        %480 = vadd.xlane.f32.xlu0 %v479
        %v481 = vpop.xlane.xlu0 %480
        %v482 = vsel %vm451, %v473, 0.0
        %483 = vadd.xlane.f32.xlu0 %v482
        %v484 = vpop.xlane.xlu0 %483
        %v485 = vsel %vm451, %v475, 0.0
        %486 = vadd.xlane.f32.xlu0 %v485
        %v487 = vpop.xlane.xlu0 %486
        %v488 = vrcp.pop %v478
        %v489 = vrcp.pop %v481
        %v490 = vrcp.pop %v484
        %v491 = vrcp.pop %v487
        %v492 = vmul.f32 %v469, %v488
        %v493 = vmul.f32 %v471, %v489
        %v494 = vmul.f32 %v473, %v490
        %v495 = vmul.f32 %v475, %v491
        %v496 = vpack.c.bf16 %v493, %v492
        %v497 = vpack.c.bf16 %v495, %v494
        %v499 = vsel %vm451, %v496, 0
        %v502 = vsel %vm451, %v497, 0
        %504 = vmatprep.subr.bf16.mxu0 0
        %505 = vmatpush1.bf16.msra.mxu0 %v385
        %506 = vmatprep.subr.bf16.mxu0 0
        %507 = vmatpush1.bf16.msra.mxu0 %v386
        %508 = vmatprep.subr.bf16.mxu0 0
        %509 = vmatpush1.bf16.msra.mxu0 0
        %510 = vmatprep.subr.bf16.mxu0 0
        %511 = vmatpush1.bf16.msra.mxu0 0
        %512 = vmatprep.subr.bf16.mxu0 0
        %513 = vmatpush1.bf16.msra.mxu0 0
        %514 = vmatprep.subr.bf16.mxu0 0
        %515 = vmatpush1.bf16.msra.mxu0 0
        %516 = vmatprep.subr.bf16.mxu0 0
        %517 = vmatpush1.bf16.msra.mxu0 0
        %518 = vmatprep.subr.bf16.mxu0 0
        %519 = vmatpush1.bf16.msra.mxu0 0
        %520 = vmatprep.subr.bf16.mxu0 0
        %521 = vmatpush1.bf16.msra.mxu0 0
        %522 = vmatprep.subr.bf16.mxu0 0
        %523 = vmatpush1.bf16.msra.mxu0 0
        %524 = vmatprep.subr.bf16.mxu0 0
        %525 = vmatpush1.bf16.msra.mxu0 0
        %526 = vmatprep.subr.bf16.mxu0 0
        %527 = vmatpush1.bf16.msra.mxu0 0
        %528 = vmatprep.subr.bf16.mxu0 0
        %529 = vmatpush1.bf16.msra.mxu0 0
        %530 = vmatprep.subr.bf16.mxu0 0
        %531 = vmatpush1.bf16.msra.mxu0 0
        %532 = vmatprep.subr.bf16.mxu0 0
        %533 = vmatpush1.bf16.msra.mxu0 0
        %534 = vmatprep.subr.bf16.mxu0 0
        %535 = vmatpush1.bf16.msra.mxu0 0
        %536 = vmatprep.mubr.bf16.mxu0 0
        %537 = vmatmul.mubr.bf16.gmra.mrb[0].mxu0 %v499
        %v538 = vpop.f32.mrb[0].mxu0
        %v539 = vadd.f32 0.0, %v538
        %v540 = vpop.f32.mrb[0].mxu0
        %v541 = vpop.f32.mrb[0].mxu0
        %v542 = vadd.f32 0.0, %v541
        %v543 = vpop.f32.mrb[0].mxu0
        %544 = vmatprep.mubr.bf16.mxu0 0
        %545 = vmatmul.mubr.bf16.gmra.mrb[0].mxu0 %v502
        %v546 = vpop.f32.mrb[0].mxu0
        %v547 = vadd.f32 0.0, %v546
        %v548 = vpop.f32.mrb[0].mxu0
        %v549 = vpop.f32.mrb[0].mxu0
        %v550 = vadd.f32 0.0, %v549
        %v551 = vpop.f32.mrb[0].mxu0
        %552 = vdwg.mxu0
        %553 = vst [vmem:[%s176] sm:$0xff] %v539
        %554 = vst [vmem:[%s176 + $0x8] sm:$0xff] %v542
        %555 = vst [vmem:[%s176 + $0x10] sm:$0xff] %v547
        %556 = vst [vmem:[%s176 + $0x18] sm:$0xff] %v550
        %s557 = sand.u32 %s75, 1
        %s558 = scalar_lea.sflag [#allocation4], %s557
        %s559 = sand.u32 %s75, 1
        %s560 = smul.addr %s559, 32
        %s561 = scalar_lea.vmem [#allocation7], %s560
        // Predicated region
        $region37: #{tpu_custom_call.1} parent=27 // pred_check
          %p562 = pneg %p85
        $region38: #{tpu_custom_call.1} parent=27 // pred_check_branch
          %564 = sbr.rel (%p562) target = $region40
        $region39: #{tpu_custom_call.1} parent=27 // pred_region
          %s566 = ssub.s32 512, 512
          %567 = vsyncadd %s558, %s566
          %s568 = smul.addr %s20, 4
          %s569 = smul.addr %s568, 128
          %s570 = scalar_lea.hbm %s2, %s569
          %s571 = sshll.u32 %s561, 4
          %s572 = int_to_ptr.vmem [resolvable:$true] %s571
          %577 = dma.vmem_to_hbm [thread:$0]  %s572, 512, %s570, %s558, 128, 128, 8
        $region40: #{tpu_custom_call.1} parent=27 // pred_fallthru
          _
      $region28: #{tpu_custom_call.1} parent=5 // pred_fallthru
        _
      %p578 = scmp.le.s32.totalorder 2, %s15
      // Predicated region
      $region41: #{tpu_custom_call.1} parent=5 // pred_check
        %p579 = pneg %p578
      $region42: #{tpu_custom_call.1} parent=5 // pred_check_branch
        %581 = sbr.rel (%p579) target = $region44
      $region43: #{tpu_custom_call.1} parent=5 // pred_region
        %s582 = ssub.s32 %s15, 2
        // Predicated region
        $region45: #{tpu_custom_call.1} parent=43 // pred_check
          %p583 = pneg %p91
        $region46: #{tpu_custom_call.1} parent=43 // pred_check_branch
          %585 = sbr.rel (%p583) target = $region48
        $region47: #{tpu_custom_call.1} parent=43 // pred_region
          %s586 = sand.u32 %s76, 1
          %s587 = scalar_lea.sflag [#allocation4], %s586
          %s588 = sand.u32 %s76, 1
          %s589 = smul.addr %s588, 32
          %s590 = scalar_lea.vmem [#allocation7], %s589
          %591 = dma.done %s587, 512
        $region48: #{tpu_custom_call.1} parent=43 // pred_fallthru
          _
      $region44: #{tpu_custom_call.1} parent=5 // pred_fallthru
        _
    $region6: #{tpu_custom_call.1} parent=1 // loop_footer
      %s19 = sadd.s32 1, %s15
    $region7: #{tpu_custom_call.1} parent=1 // loop_footer_branch
      %14 = sbr.rel target = $region3
    $region8: #{tpu_custom_call.1} parent=1 // loop_exit
      _
    %592 = vsyncpa [#allocation3], 1
    %s593 = scalar_lea.sflag [#allocation3], 1
    %594 = vsyncpa %s593, 1
    %595 = vsyncpa [#allocation6], 1
    %596 = vsyncpa [#allocation4], 1
    %s597 = scalar_lea.sflag [#allocation4], 1
    %598 = vsyncpa %s597, 1

</llo_original>
